<compile_context>
chip_gen: v5e
topology: v5e:2x2
jax: 0.10.0
libtpu: 0.0.40
codegen_flags: <defaults>
</compile_context>

<pallas_src>
import functools

import jax
import jax.numpy as jnp
from jax.experimental import pallas as pl
from jax.experimental.pallas import tpu as pltpu


# ----------------------------- Fused kernel ---------------------------------

def _fused_kernel(x_ref, wih_ref, whh_ref, b_ref,
                  w1_ref, b1_ref, w2_ref, b2_ref,
                  q_ref, *, batch, seq, hidden):
    B, T, H = batch, seq, hidden

    # Input->gate contributions for every timestep in one MXU pass (bias folded in).
    #   x_ref: (B*T, IN), wih_ref: (IN, 4H)  ->  (B*T, 4H) -> (B, T, 4H)
    xg = jnp.dot(x_ref[...], wih_ref[...],
                 preferred_element_type=jnp.float32) + b_ref[...]
    xg = xg.reshape(B, T, 4 * H)

    whh = whh_ref[...]                                   # (H, 4H), loaded once
    h = jnp.zeros((B, H), jnp.float32)
    c = jnp.zeros((B, H), jnp.float32)

    # T is static and small: fully unrolled; h/c stay in registers.
    # (For long sequences this would become a lax.fori_loop with (h, c) carry.)
    for t in range(T):
        gates = xg[:, t, :] + jnp.dot(h, whh, preferred_element_type=jnp.float32)
        sig = jax.nn.sigmoid(gates)      # full-vreg EUP op, slice afterwards
        tnh = jnp.tanh(gates)
        i = sig[:, 0 * H:1 * H]
        f = sig[:, 1 * H:2 * H]
        g = tnh[:, 2 * H:3 * H]
        o = sig[:, 3 * H:4 * H]
        c = f * c + i * g
        h = o * jnp.tanh(c)

    # Dueling head (fused): z1 = relu(h @ [Wv | Wa] + [bv | ba])   -> (B, 256)
    #                       out2 = z1 @ blockdiag(Wv2, Wa2) + [bv2 | ba2] -> (B, 1+OUT)
    z1 = jnp.maximum(
        jnp.dot(h, w1_ref[...], preferred_element_type=jnp.float32) + b1_ref[...],
        0.0)
    out2 = jnp.dot(z1, w2_ref[...], preferred_element_type=jnp.float32) + b2_ref[...]
    value = out2[:, :1]                                   # (B, 1)
    adv = out2[:, 1:]                                     # (B, OUT)
    q_ref[...] = value + (adv - jnp.mean(adv, axis=1, keepdims=True))


# ------------------------------ Wrapper --------------------------------------

def santa_fe_lstm_forward(x, params):
    """x: (B, T, IN) float32 (PyTorch batch_first layout). params: prepared (fused)."""
    (w_ih_t, w_hh_t, b_lstm, w1, b1, w2, b2) = params
    B, T, IN = x.shape
    H = w_hh_t.shape[0]
    OUT = w2.shape[1] - 1
    x2d = x.reshape(B * T, IN)            # contiguous collapse: free, no transpose

    kernel = functools.partial(_fused_kernel, batch=B, seq=T, hidden=H)
    full = lambda shape: pl.BlockSpec(shape, lambda i, _s=len(shape): (0,) * _s)

    return pl.pallas_call(
        kernel,
        out_shape=jax.ShapeDtypeStruct((B, OUT), jnp.float32),
        grid_spec=pltpu.PrefetchScalarGridSpec(
            num_scalar_prefetch=0,
            grid=(1,),                    # single invocation; everything resident in VMEM
            in_specs=[
                full(x2d.shape),          # (B*T, IN)
                full(w_ih_t.shape),       # (IN, 4H)
                full(w_hh_t.shape),       # (H, 4H)
                full(b_lstm.shape),       # (1, 4H)
                full(w1.shape),           # (H, 256)
                full(b1.shape),           # (1, 256)
                full(w2.shape),           # (256, 1+OUT)
                full(b2.shape),           # (1, 1+OUT)
            ],
            out_specs=full((B, OUT)),
        ),
        compiler_params=pltpu.CompilerParams(dimension_semantics=("arbitrary",)),
    )(x2d, w_ih_t, w_hh_t, b_lstm, w1, b1, w2, b2)


# ------------------------- Reference (pure JAX) -------------------------------

def ref_forward(x, raw_params):
    (w_ih_t, w_hh_t, b_lstm, wv, bv, wa, ba, wv2, bv2, wa2, ba2) = raw_params
    B, T, _ = x.shape
    H = w_hh_t.shape[0]
    h = jnp.zeros((B, H), jnp.float32)
    c = jnp.zeros((B, H), jnp.float32)
    for t in range(T):
        gates = x[:, t, :] @ w_ih_t + h @ w_hh_t + b_lstm
        i = jax.nn.sigmoid(gates[:, :H])
        f = jax.nn.sigmoid(gates[:, H:2 * H])
        g = jnp.tanh(gates[:, 2 * H:3 * H])
        o = jax.nn.sigmoid(gates[:, 3 * H:])
        c = f * c + i * g
        h = o * jnp.tanh(c)
    v1 = jax.nn.relu(h @ wv + bv)
    a1 = jax.nn.relu(h @ wa + ba)
    value = v1 @ wv2 + bv2
    adv = a1 @ wa2 + ba2
    return value + (adv - adv.mean(axis=1, keepdims=True))


# ------------------------------- Params ---------------------------------------

def init_params(key, input_size, hidden_size, output_size):
    """Raw per-layer params mirroring the PyTorch module's shapes (weights transposed)."""
    ks = jax.random.split(key, 12)
    u = lambda k, shape, bound: jax.random.uniform(
        k, shape, jnp.float32, minval=-bound, maxval=bound)
    bl = 1.0 / jnp.sqrt(hidden_size)
    w_ih_t = u(ks[0], (input_size, 4 * hidden_size), bl)
    w_hh_t = u(ks[1], (hidden_size, 4 * hidden_size), bl)
    b_lstm = u(ks[2], (1, 4 * hidden_size), bl) + u(ks[3], (1, 4 * hidden_size), bl)
    bh = 1.0 / jnp.sqrt(hidden_size)
    wv = u(ks[4], (hidden_size, 128), bh)
    bv = u(ks[5], (1, 128), bh)
    wa = u(ks[6], (hidden_size, 128), bh)
    ba = u(ks[7], (1, 128), bh)
    b128 = 1.0 / jnp.sqrt(128.0)
    wv2 = u(ks[8], (128, 1), b128)
    bv2 = u(ks[9], (1, 1), b128)
    wa2 = u(ks[10], (128, output_size), b128)
    ba2 = u(ks[11], (1, output_size), b128)
    return (w_ih_t, w_hh_t, b_lstm, wv, bv, wa, ba, wv2, bv2, wa2, ba2)


def prepare_params(raw_params):
    """One-time fusion of the head weights so the kernel does 2 head matmuls, not 4."""
    (w_ih_t, w_hh_t, b_lstm, wv, bv, wa, ba, wv2, bv2, wa2, ba2) = raw_params
    hid1 = wv.shape[1]                                      # 128
    out = wa2.shape[1]
    w1 = jnp.concatenate([wv, wa], axis=1)                  # (H, 2*128)
    b1 = jnp.concatenate([bv, ba], axis=1)                  # (1, 2*128)
    w2 = jnp.zeros((2 * hid1, 1 + out), jnp.float32)        # block-diagonal
    w2 = w2.at[:hid1, :1].set(wv2)
    w2 = w2.at[hid1:, 1:].set(wa2)
    b2 = jnp.concatenate([bv2, ba2], axis=1)                # (1, 1+OUT)
    return (w_ih_t, w_hh_t, b_lstm, w1, b1, w2, b2)


if __name__ == "__main__":
    B, T, IN, H, OUT = 2, 8, 4, 32, 4
    key = jax.random.PRNGKey(0)
    k_x, k_p = jax.random.split(key)
    x = jax.random.normal(k_x, (B, T, IN), jnp.float32)
    raw_params = init_params(k_p, IN, H, OUT)
    params = jax.tree_util.tree_map(jax.block_until_ready, prepare_params(raw_params))

    forward = jax.jit(santa_fe_lstm_forward)
    q = jax.block_until_ready(forward(x, params))
    q_ref = ref_forward(x, raw_params)

    assert q.shape == (B, OUT), q.shape
    assert jnp.allclose(q, q_ref, atol=1e-4, rtol=1e-4), (
        "mismatch vs reference", q, q_ref)
    print("KERNEL_OK")
</pallas_src>

<mosaic_0001>
module attributes {stable_mosaic.version = 11 : i64} {
  func.func @_fused_kernel(%arg0: i32, %arg1: memref<16x4xf32, #tpu.memory_space<vmem>>, %arg2: memref<4x128xf32, #tpu.memory_space<vmem>>, %arg3: memref<32x128xf32, #tpu.memory_space<vmem>>, %arg4: memref<1x128xf32, #tpu.memory_space<vmem>>, %arg5: memref<32x256xf32, #tpu.memory_space<vmem>>, %arg6: memref<1x256xf32, #tpu.memory_space<vmem>>, %arg7: memref<256x5xf32, #tpu.memory_space<vmem>>, %arg8: memref<1x5xf32, #tpu.memory_space<vmem>>, %arg9: memref<2x4xf32, #tpu.memory_space<vmem>>) attributes {dimension_semantics = [#tpu.dimension_semantics<arbitrary>], iteration_bounds = array<i64: 1>, scalar_prefetch = 0 : i64, scratch_operands = 0 : i64, tpu.core_type = #tpu.core_type<tc>, window_params = [{pipeline_mode = #tpu.pipeline_mode<synchronous>, transform_indices = @transform_0, window_bounds = array<i64: 16, 4>}, {pipeline_mode = #tpu.pipeline_mode<synchronous>, transform_indices = @transform_1, window_bounds = array<i64: 4, 128>}, {pipeline_mode = #tpu.pipeline_mode<synchronous>, transform_indices = @transform_2, window_bounds = array<i64: 32, 128>}, {pipeline_mode = #tpu.pipeline_mode<synchronous>, transform_indices = @transform_3, window_bounds = array<i64: 1, 128>}, {pipeline_mode = #tpu.pipeline_mode<synchronous>, transform_indices = @transform_4, window_bounds = array<i64: 32, 256>}, {pipeline_mode = #tpu.pipeline_mode<synchronous>, transform_indices = @transform_5, window_bounds = array<i64: 1, 256>}, {pipeline_mode = #tpu.pipeline_mode<synchronous>, transform_indices = @transform_6, window_bounds = array<i64: 256, 5>}, {pipeline_mode = #tpu.pipeline_mode<synchronous>, transform_indices = @transform_7, window_bounds = array<i64: 1, 5>}, {pipeline_mode = #tpu.pipeline_mode<synchronous>, transform_indices = @transform_8, window_bounds = array<i64: 2, 4>}]} {
    %c0 = arith.constant 0 : index
    %c0_0 = arith.constant 0 : index
    %0 = vector.load %arg1[%c0, %c0_0] : memref<16x4xf32, #tpu.memory_space<vmem>>, vector<16x4xf32>
    %c0_1 = arith.constant 0 : index
    %c0_2 = arith.constant 0 : index
    %1 = vector.load %arg2[%c0_1, %c0_2] : memref<4x128xf32, #tpu.memory_space<vmem>>, vector<4x128xf32>
    %cst = arith.constant dense<0.000000e+00> : vector<16x128xf32>
    %2 = tpu.matmul %0, %1, %cst {dimension_numbers = #tpu.dot_dimension_numbers<[1], [0], [0], [1], [0, 0, 1, 1], [], []>} : vector<16x4xf32>, vector<4x128xf32>, vector<16x128xf32> -> vector<16x128xf32>
    %c0_3 = arith.constant 0 : index
    %c0_4 = arith.constant 0 : index
    %3 = vector.load %arg4[%c0_3, %c0_4] : memref<1x128xf32, #tpu.memory_space<vmem>>, vector<1x128xf32>
    %4 = vector.broadcast %3 : vector<1x128xf32> to vector<16x128xf32>
    %5 = arith.addf %2, %4 : vector<16x128xf32>
    %6 = vector.shape_cast %5 : vector<16x128xf32> to vector<2x8x128xf32>
    %c0_5 = arith.constant 0 : index
    %c0_6 = arith.constant 0 : index
    %7 = vector.load %arg3[%c0_5, %c0_6] : memref<32x128xf32, #tpu.memory_space<vmem>>, vector<32x128xf32>
    %cst_7 = arith.constant 0.000000e+00 : f32
    %8 = vector.broadcast %cst_7 : f32 to vector<2x32xf32>
    %cst_8 = arith.constant 0.000000e+00 : f32
    %9 = vector.broadcast %cst_8 : f32 to vector<2x32xf32>
    %10 = vector.extract_strided_slice %6 {offsets = [0, 0, 0], sizes = [2, 1, 128], strides = [1, 1, 1]} : vector<2x8x128xf32> to vector<2x1x128xf32>
    %11 = vector.shape_cast %10 : vector<2x1x128xf32> to vector<2x128xf32>
    %cst_9 = arith.constant dense<0.000000e+00> : vector<2x128xf32>
    %12 = tpu.matmul %8, %7, %cst_9 {dimension_numbers = #tpu.dot_dimension_numbers<[1], [0], [0], [1], [0, 0, 1, 1], [], []>} : vector<2x32xf32>, vector<32x128xf32>, vector<2x128xf32> -> vector<2x128xf32>
    %13 = arith.addf %11, %12 : vector<2x128xf32>
    %14 = arith.negf %13 : vector<2x128xf32>
    %15 = math.exp %14 : vector<2x128xf32>
    %cst_10 = arith.constant 1.000000e+00 : f32
    %16 = vector.broadcast %cst_10 : f32 to vector<2x128xf32>
    %17 = arith.addf %16, %15 : vector<2x128xf32>
    %18 = arith.divf %16, %17 : vector<2x128xf32>
    %19 = math.tanh %13 : vector<2x128xf32>
    %20 = vector.extract_strided_slice %18 {offsets = [0, 0], sizes = [2, 32], strides = [1, 1]} : vector<2x128xf32> to vector<2x32xf32>
    %21 = vector.extract_strided_slice %18 {offsets = [0, 32], sizes = [2, 32], strides = [1, 1]} : vector<2x128xf32> to vector<2x32xf32>
    %22 = vector.extract_strided_slice %19 {offsets = [0, 64], sizes = [2, 32], strides = [1, 1]} : vector<2x128xf32> to vector<2x32xf32>
    %23 = vector.extract_strided_slice %18 {offsets = [0, 96], sizes = [2, 32], strides = [1, 1]} : vector<2x128xf32> to vector<2x32xf32>
    %24 = arith.mulf %21, %9 : vector<2x32xf32>
    %25 = arith.mulf %20, %22 : vector<2x32xf32>
    %26 = arith.addf %24, %25 : vector<2x32xf32>
    %27 = math.tanh %26 : vector<2x32xf32>
    %28 = arith.mulf %23, %27 : vector<2x32xf32>
    %29 = vector.extract_strided_slice %6 {offsets = [0, 1, 0], sizes = [2, 1, 128], strides = [1, 1, 1]} : vector<2x8x128xf32> to vector<2x1x128xf32>
    %30 = vector.shape_cast %29 : vector<2x1x128xf32> to vector<2x128xf32>
    %cst_11 = arith.constant dense<0.000000e+00> : vector<2x128xf32>
    %31 = tpu.matmul %28, %7, %cst_11 {dimension_numbers = #tpu.dot_dimension_numbers<[1], [0], [0], [1], [0, 0, 1, 1], [], []>} : vector<2x32xf32>, vector<32x128xf32>, vector<2x128xf32> -> vector<2x128xf32>
    %32 = arith.addf %30, %31 : vector<2x128xf32>
    %33 = arith.negf %32 : vector<2x128xf32>
    %34 = math.exp %33 : vector<2x128xf32>
    %cst_12 = arith.constant 1.000000e+00 : f32
    %35 = vector.broadcast %cst_12 : f32 to vector<2x128xf32>
    %36 = arith.addf %35, %34 : vector<2x128xf32>
    %37 = arith.divf %35, %36 : vector<2x128xf32>
    %38 = math.tanh %32 : vector<2x128xf32>
    %39 = vector.extract_strided_slice %37 {offsets = [0, 0], sizes = [2, 32], strides = [1, 1]} : vector<2x128xf32> to vector<2x32xf32>
    %40 = vector.extract_strided_slice %37 {offsets = [0, 32], sizes = [2, 32], strides = [1, 1]} : vector<2x128xf32> to vector<2x32xf32>
    %41 = vector.extract_strided_slice %38 {offsets = [0, 64], sizes = [2, 32], strides = [1, 1]} : vector<2x128xf32> to vector<2x32xf32>
    %42 = vector.extract_strided_slice %37 {offsets = [0, 96], sizes = [2, 32], strides = [1, 1]} : vector<2x128xf32> to vector<2x32xf32>
    %43 = arith.mulf %40, %26 : vector<2x32xf32>
    %44 = arith.mulf %39, %41 : vector<2x32xf32>
    %45 = arith.addf %43, %44 : vector<2x32xf32>
    %46 = math.tanh %45 : vector<2x32xf32>
    %47 = arith.mulf %42, %46 : vector<2x32xf32>
    %48 = vector.extract_strided_slice %6 {offsets = [0, 2, 0], sizes = [2, 1, 128], strides = [1, 1, 1]} : vector<2x8x128xf32> to vector<2x1x128xf32>
    %49 = vector.shape_cast %48 : vector<2x1x128xf32> to vector<2x128xf32>
    %cst_13 = arith.constant dense<0.000000e+00> : vector<2x128xf32>
    %50 = tpu.matmul %47, %7, %cst_13 {dimension_numbers = #tpu.dot_dimension_numbers<[1], [0], [0], [1], [0, 0, 1, 1], [], []>} : vector<2x32xf32>, vector<32x128xf32>, vector<2x128xf32> -> vector<2x128xf32>
    %51 = arith.addf %49, %50 : vector<2x128xf32>
    %52 = arith.negf %51 : vector<2x128xf32>
    %53 = math.exp %52 : vector<2x128xf32>
    %cst_14 = arith.constant 1.000000e+00 : f32
    %54 = vector.broadcast %cst_14 : f32 to vector<2x128xf32>
    %55 = arith.addf %54, %53 : vector<2x128xf32>
    %56 = arith.divf %54, %55 : vector<2x128xf32>
    %57 = math.tanh %51 : vector<2x128xf32>
    %58 = vector.extract_strided_slice %56 {offsets = [0, 0], sizes = [2, 32], strides = [1, 1]} : vector<2x128xf32> to vector<2x32xf32>
    %59 = vector.extract_strided_slice %56 {offsets = [0, 32], sizes = [2, 32], strides = [1, 1]} : vector<2x128xf32> to vector<2x32xf32>
    %60 = vector.extract_strided_slice %57 {offsets = [0, 64], sizes = [2, 32], strides = [1, 1]} : vector<2x128xf32> to vector<2x32xf32>
    %61 = vector.extract_strided_slice %56 {offsets = [0, 96], sizes = [2, 32], strides = [1, 1]} : vector<2x128xf32> to vector<2x32xf32>
    %62 = arith.mulf %59, %45 : vector<2x32xf32>
    %63 = arith.mulf %58, %60 : vector<2x32xf32>
    %64 = arith.addf %62, %63 : vector<2x32xf32>
    %65 = math.tanh %64 : vector<2x32xf32>
    %66 = arith.mulf %61, %65 : vector<2x32xf32>
    %67 = vector.extract_strided_slice %6 {offsets = [0, 3, 0], sizes = [2, 1, 128], strides = [1, 1, 1]} : vector<2x8x128xf32> to vector<2x1x128xf32>
    %68 = vector.shape_cast %67 : vector<2x1x128xf32> to vector<2x128xf32>
    %cst_15 = arith.constant dense<0.000000e+00> : vector<2x128xf32>
    %69 = tpu.matmul %66, %7, %cst_15 {dimension_numbers = #tpu.dot_dimension_numbers<[1], [0], [0], [1], [0, 0, 1, 1], [], []>} : vector<2x32xf32>, vector<32x128xf32>, vector<2x128xf32> -> vector<2x128xf32>
    %70 = arith.addf %68, %69 : vector<2x128xf32>
    %71 = arith.negf %70 : vector<2x128xf32>
    %72 = math.exp %71 : vector<2x128xf32>
    %cst_16 = arith.constant 1.000000e+00 : f32
    %73 = vector.broadcast %cst_16 : f32 to vector<2x128xf32>
    %74 = arith.addf %73, %72 : vector<2x128xf32>
    %75 = arith.divf %73, %74 : vector<2x128xf32>
    %76 = math.tanh %70 : vector<2x128xf32>
    %77 = vector.extract_strided_slice %75 {offsets = [0, 0], sizes = [2, 32], strides = [1, 1]} : vector<2x128xf32> to vector<2x32xf32>
    %78 = vector.extract_strided_slice %75 {offsets = [0, 32], sizes = [2, 32], strides = [1, 1]} : vector<2x128xf32> to vector<2x32xf32>
    %79 = vector.extract_strided_slice %76 {offsets = [0, 64], sizes = [2, 32], strides = [1, 1]} : vector<2x128xf32> to vector<2x32xf32>
    %80 = vector.extract_strided_slice %75 {offsets = [0, 96], sizes = [2, 32], strides = [1, 1]} : vector<2x128xf32> to vector<2x32xf32>
    %81 = arith.mulf %78, %64 : vector<2x32xf32>
    %82 = arith.mulf %77, %79 : vector<2x32xf32>
    %83 = arith.addf %81, %82 : vector<2x32xf32>
    %84 = math.tanh %83 : vector<2x32xf32>
    %85 = arith.mulf %80, %84 : vector<2x32xf32>
    %86 = vector.extract_strided_slice %6 {offsets = [0, 4, 0], sizes = [2, 1, 128], strides = [1, 1, 1]} : vector<2x8x128xf32> to vector<2x1x128xf32>
    %87 = vector.shape_cast %86 : vector<2x1x128xf32> to vector<2x128xf32>
    %cst_17 = arith.constant dense<0.000000e+00> : vector<2x128xf32>
    %88 = tpu.matmul %85, %7, %cst_17 {dimension_numbers = #tpu.dot_dimension_numbers<[1], [0], [0], [1], [0, 0, 1, 1], [], []>} : vector<2x32xf32>, vector<32x128xf32>, vector<2x128xf32> -> vector<2x128xf32>
    %89 = arith.addf %87, %88 : vector<2x128xf32>
    %90 = arith.negf %89 : vector<2x128xf32>
    %91 = math.exp %90 : vector<2x128xf32>
    %cst_18 = arith.constant 1.000000e+00 : f32
    %92 = vector.broadcast %cst_18 : f32 to vector<2x128xf32>
    %93 = arith.addf %92, %91 : vector<2x128xf32>
    %94 = arith.divf %92, %93 : vector<2x128xf32>
    %95 = math.tanh %89 : vector<2x128xf32>
    %96 = vector.extract_strided_slice %94 {offsets = [0, 0], sizes = [2, 32], strides = [1, 1]} : vector<2x128xf32> to vector<2x32xf32>
    %97 = vector.extract_strided_slice %94 {offsets = [0, 32], sizes = [2, 32], strides = [1, 1]} : vector<2x128xf32> to vector<2x32xf32>
    %98 = vector.extract_strided_slice %95 {offsets = [0, 64], sizes = [2, 32], strides = [1, 1]} : vector<2x128xf32> to vector<2x32xf32>
    %99 = vector.extract_strided_slice %94 {offsets = [0, 96], sizes = [2, 32], strides = [1, 1]} : vector<2x128xf32> to vector<2x32xf32>
    %100 = arith.mulf %97, %83 : vector<2x32xf32>
    %101 = arith.mulf %96, %98 : vector<2x32xf32>
    %102 = arith.addf %100, %101 : vector<2x32xf32>
    %103 = math.tanh %102 : vector<2x32xf32>
    %104 = arith.mulf %99, %103 : vector<2x32xf32>
    %105 = vector.extract_strided_slice %6 {offsets = [0, 5, 0], sizes = [2, 1, 128], strides = [1, 1, 1]} : vector<2x8x128xf32> to vector<2x1x128xf32>
    %106 = vector.shape_cast %105 : vector<2x1x128xf32> to vector<2x128xf32>
    %cst_19 = arith.constant dense<0.000000e+00> : vector<2x128xf32>
    %107 = tpu.matmul %104, %7, %cst_19 {dimension_numbers = #tpu.dot_dimension_numbers<[1], [0], [0], [1], [0, 0, 1, 1], [], []>} : vector<2x32xf32>, vector<32x128xf32>, vector<2x128xf32> -> vector<2x128xf32>
    %108 = arith.addf %106, %107 : vector<2x128xf32>
    %109 = arith.negf %108 : vector<2x128xf32>
    %110 = math.exp %109 : vector<2x128xf32>
    %cst_20 = arith.constant 1.000000e+00 : f32
    %111 = vector.broadcast %cst_20 : f32 to vector<2x128xf32>
    %112 = arith.addf %111, %110 : vector<2x128xf32>
    %113 = arith.divf %111, %112 : vector<2x128xf32>
    %114 = math.tanh %108 : vector<2x128xf32>
    %115 = vector.extract_strided_slice %113 {offsets = [0, 0], sizes = [2, 32], strides = [1, 1]} : vector<2x128xf32> to vector<2x32xf32>
    %116 = vector.extract_strided_slice %113 {offsets = [0, 32], sizes = [2, 32], strides = [1, 1]} : vector<2x128xf32> to vector<2x32xf32>
    %117 = vector.extract_strided_slice %114 {offsets = [0, 64], sizes = [2, 32], strides = [1, 1]} : vector<2x128xf32> to vector<2x32xf32>
    %118 = vector.extract_strided_slice %113 {offsets = [0, 96], sizes = [2, 32], strides = [1, 1]} : vector<2x128xf32> to vector<2x32xf32>
    %119 = arith.mulf %116, %102 : vector<2x32xf32>
    %120 = arith.mulf %115, %117 : vector<2x32xf32>
    %121 = arith.addf %119, %120 : vector<2x32xf32>
    %122 = math.tanh %121 : vector<2x32xf32>
    %123 = arith.mulf %118, %122 : vector<2x32xf32>
    %124 = vector.extract_strided_slice %6 {offsets = [0, 6, 0], sizes = [2, 1, 128], strides = [1, 1, 1]} : vector<2x8x128xf32> to vector<2x1x128xf32>
    %125 = vector.shape_cast %124 : vector<2x1x128xf32> to vector<2x128xf32>
    %cst_21 = arith.constant dense<0.000000e+00> : vector<2x128xf32>
    %126 = tpu.matmul %123, %7, %cst_21 {dimension_numbers = #tpu.dot_dimension_numbers<[1], [0], [0], [1], [0, 0, 1, 1], [], []>} : vector<2x32xf32>, vector<32x128xf32>, vector<2x128xf32> -> vector<2x128xf32>
    %127 = arith.addf %125, %126 : vector<2x128xf32>
    %128 = arith.negf %127 : vector<2x128xf32>
    %129 = math.exp %128 : vector<2x128xf32>
    %cst_22 = arith.constant 1.000000e+00 : f32
    %130 = vector.broadcast %cst_22 : f32 to vector<2x128xf32>
    %131 = arith.addf %130, %129 : vector<2x128xf32>
    %132 = arith.divf %130, %131 : vector<2x128xf32>
    %133 = math.tanh %127 : vector<2x128xf32>
    %134 = vector.extract_strided_slice %132 {offsets = [0, 0], sizes = [2, 32], strides = [1, 1]} : vector<2x128xf32> to vector<2x32xf32>
    %135 = vector.extract_strided_slice %132 {offsets = [0, 32], sizes = [2, 32], strides = [1, 1]} : vector<2x128xf32> to vector<2x32xf32>
    %136 = vector.extract_strided_slice %133 {offsets = [0, 64], sizes = [2, 32], strides = [1, 1]} : vector<2x128xf32> to vector<2x32xf32>
    %137 = vector.extract_strided_slice %132 {offsets = [0, 96], sizes = [2, 32], strides = [1, 1]} : vector<2x128xf32> to vector<2x32xf32>
    %138 = arith.mulf %135, %121 : vector<2x32xf32>
    %139 = arith.mulf %134, %136 : vector<2x32xf32>
    %140 = arith.addf %138, %139 : vector<2x32xf32>
    %141 = math.tanh %140 : vector<2x32xf32>
    %142 = arith.mulf %137, %141 : vector<2x32xf32>
    %143 = vector.extract_strided_slice %6 {offsets = [0, 7, 0], sizes = [2, 1, 128], strides = [1, 1, 1]} : vector<2x8x128xf32> to vector<2x1x128xf32>
    %144 = vector.shape_cast %143 : vector<2x1x128xf32> to vector<2x128xf32>
    %cst_23 = arith.constant dense<0.000000e+00> : vector<2x128xf32>
    %145 = tpu.matmul %142, %7, %cst_23 {dimension_numbers = #tpu.dot_dimension_numbers<[1], [0], [0], [1], [0, 0, 1, 1], [], []>} : vector<2x32xf32>, vector<32x128xf32>, vector<2x128xf32> -> vector<2x128xf32>
    %146 = arith.addf %144, %145 : vector<2x128xf32>
    %147 = arith.negf %146 : vector<2x128xf32>
    %148 = math.exp %147 : vector<2x128xf32>
    %cst_24 = arith.constant 1.000000e+00 : f32
    %149 = vector.broadcast %cst_24 : f32 to vector<2x128xf32>
    %150 = arith.addf %149, %148 : vector<2x128xf32>
    %151 = arith.divf %149, %150 : vector<2x128xf32>
    %152 = math.tanh %146 : vector<2x128xf32>
    %153 = vector.extract_strided_slice %151 {offsets = [0, 0], sizes = [2, 32], strides = [1, 1]} : vector<2x128xf32> to vector<2x32xf32>
    %154 = vector.extract_strided_slice %151 {offsets = [0, 32], sizes = [2, 32], strides = [1, 1]} : vector<2x128xf32> to vector<2x32xf32>
    %155 = vector.extract_strided_slice %152 {offsets = [0, 64], sizes = [2, 32], strides = [1, 1]} : vector<2x128xf32> to vector<2x32xf32>
    %156 = vector.extract_strided_slice %151 {offsets = [0, 96], sizes = [2, 32], strides = [1, 1]} : vector<2x128xf32> to vector<2x32xf32>
    %157 = arith.mulf %154, %140 : vector<2x32xf32>
    %158 = arith.mulf %153, %155 : vector<2x32xf32>
    %159 = arith.addf %157, %158 : vector<2x32xf32>
    %160 = math.tanh %159 : vector<2x32xf32>
    %161 = arith.mulf %156, %160 : vector<2x32xf32>
    %c0_25 = arith.constant 0 : index
    %c0_26 = arith.constant 0 : index
    %162 = vector.load %arg5[%c0_25, %c0_26] : memref<32x256xf32, #tpu.memory_space<vmem>>, vector<32x256xf32>
    %cst_27 = arith.constant dense<0.000000e+00> : vector<2x256xf32>
    %163 = tpu.matmul %161, %162, %cst_27 {dimension_numbers = #tpu.dot_dimension_numbers<[1], [0], [0], [1], [0, 0, 1, 1], [], []>} : vector<2x32xf32>, vector<32x256xf32>, vector<2x256xf32> -> vector<2x256xf32>
    %c0_28 = arith.constant 0 : index
    %c0_29 = arith.constant 0 : index
    %164 = vector.load %arg6[%c0_28, %c0_29] : memref<1x256xf32, #tpu.memory_space<vmem>>, vector<1x256xf32>
    %165 = vector.broadcast %164 : vector<1x256xf32> to vector<2x256xf32>
    %166 = arith.addf %163, %165 : vector<2x256xf32>
    %cst_30 = arith.constant 0.000000e+00 : f32
    %167 = vector.broadcast %cst_30 : f32 to vector<2x256xf32>
    %168 = arith.maximumf %166, %167 : vector<2x256xf32>
    %c0_31 = arith.constant 0 : index
    %c0_32 = arith.constant 0 : index
    %169 = vector.load %arg7[%c0_31, %c0_32] : memref<256x5xf32, #tpu.memory_space<vmem>>, vector<256x5xf32>
    %cst_33 = arith.constant dense<0.000000e+00> : vector<2x5xf32>
    %170 = tpu.matmul %168, %169, %cst_33 {dimension_numbers = #tpu.dot_dimension_numbers<[1], [0], [0], [1], [0, 0, 1, 1], [], []>} : vector<2x256xf32>, vector<256x5xf32>, vector<2x5xf32> -> vector<2x5xf32>
    %c0_34 = arith.constant 0 : index
    %c0_35 = arith.constant 0 : index
    %171 = vector.load %arg8[%c0_34, %c0_35] : memref<1x5xf32, #tpu.memory_space<vmem>>, vector<1x5xf32>
    %172 = vector.broadcast %171 : vector<1x5xf32> to vector<2x5xf32>
    %173 = arith.addf %170, %172 : vector<2x5xf32>
    %174 = vector.extract_strided_slice %173 {offsets = [0, 0], sizes = [2, 1], strides = [1, 1]} : vector<2x5xf32> to vector<2x1xf32>
    %175 = vector.extract_strided_slice %173 {offsets = [0, 1], sizes = [2, 4], strides = [1, 1]} : vector<2x5xf32> to vector<2x4xf32>
    %cst_36 = arith.constant dense<0.000000e+00> : vector<2xf32>
    %176 = vector.multi_reduction <add>, %175, %cst_36 [1] : vector<2x4xf32> to vector<2xf32>
    %177 = vector.shape_cast %176 : vector<2xf32> to vector<2x1xf32>
    %cst_37 = arith.constant 4.000000e+00 : f32
    %178 = vector.broadcast %cst_37 : f32 to vector<2x1xf32>
    %179 = arith.divf %177, %178 : vector<2x1xf32>
    %180 = vector.broadcast %179 : vector<2x1xf32> to vector<2x4xf32>
    %181 = arith.subf %175, %180 : vector<2x4xf32>
    %182 = vector.broadcast %174 : vector<2x1xf32> to vector<2x4xf32>
    %183 = arith.addf %182, %181 : vector<2x4xf32>
    %c0_38 = arith.constant 0 : index
    %c0_39 = arith.constant 0 : index
    %184 = vector.load %arg9[%c0_38, %c0_39] : memref<2x4xf32, #tpu.memory_space<vmem>>, vector<2x4xf32>
    tpu.vector_store %arg9[%c0_38, %c0_39], %183 {strides = array<i32>} : memref<2x4xf32, #tpu.memory_space<vmem>>, vector<2x4xf32>,
    return
  }
  func.func @transform_0(%arg0: i32) -> (i32, i32) {
    %c0_i32 = arith.constant 0 : i32
    %c0_i32_0 = arith.constant 0 : i32
    %c0_i32_1 = arith.constant 0 : i32
    return %c0_i32, %c0_i32_0 : i32, i32
  }
  func.func @transform_1(%arg0: i32) -> (i32, i32) {
    %c0_i32 = arith.constant 0 : i32
    %c0_i32_0 = arith.constant 0 : i32
    %c0_i32_1 = arith.constant 0 : i32
    return %c0_i32, %c0_i32_0 : i32, i32
  }
  func.func @transform_2(%arg0: i32) -> (i32, i32) {
    %c0_i32 = arith.constant 0 : i32
    %c0_i32_0 = arith.constant 0 : i32
    %c0_i32_1 = arith.constant 0 : i32
    return %c0_i32, %c0_i32_0 : i32, i32
  }
  func.func @transform_3(%arg0: i32) -> (i32, i32) {
    %c0_i32 = arith.constant 0 : i32
    %c0_i32_0 = arith.constant 0 : i32
    %c0_i32_1 = arith.constant 0 : i32
    return %c0_i32, %c0_i32_0 : i32, i32
  }
  func.func @transform_4(%arg0: i32) -> (i32, i32) {
    %c0_i32 = arith.constant 0 : i32
    %c0_i32_0 = arith.constant 0 : i32
    %c0_i32_1 = arith.constant 0 : i32
    return %c0_i32, %c0_i32_0 : i32, i32
  }
  func.func @transform_5(%arg0: i32) -> (i32, i32) {
    %c0_i32 = arith.constant 0 : i32
    %c0_i32_0 = arith.constant 0 : i32
    %c0_i32_1 = arith.constant 0 : i32
    return %c0_i32, %c0_i32_0 : i32, i32
  }
  func.func @transform_6(%arg0: i32) -> (i32, i32) {
    %c0_i32 = arith.constant 0 : i32
    %c0_i32_0 = arith.constant 0 : i32
    %c0_i32_1 = arith.constant 0 : i32
    return %c0_i32, %c0_i32_0 : i32, i32
  }
  func.func @transform_7(%arg0: i32) -> (i32, i32) {
    %c0_i32 = arith.constant 0 : i32
    %c0_i32_0 = arith.constant 0 : i32
    %c0_i32_1 = arith.constant 0 : i32
    return %c0_i32, %c0_i32_0 : i32, i32
  }
  func.func @transform_8(%arg0: i32) -> (i32, i32) {
    %c0_i32 = arith.constant 0 : i32
    %c0_i32_0 = arith.constant 0 : i32
    %c0_i32_1 = arith.constant 0 : i32
    return %c0_i32, %c0_i32_0 : i32, i32
  }
}

</mosaic_0001>

<llo_original>
// kernel: santa_fe_lstm_forward.1
$region0: #{santa_fe_lstm_forward.1}
  #allocation0 [shape = 'u32[]', space=smem, size = 0x4, offset = 0x4, fixed_abs, tag = 'smem constant byte address 0x4 - core index']
  #allocation1 [shape = 'u32[72,128]{1,0:T(1,128)}', space=vmem, size = 0x9000, scoped, tag = 'internal scratch']
  %s0 = inlined_call_operand.vmem [shape: f32[16,4], index: 0, kind: input, shape index: {}]
  %s1 = inlined_call_operand.vmem [shape: f32[4,128], index: 1, kind: input, shape index: {}]
  %s2 = inlined_call_operand.vmem [shape: f32[32,128], index: 2, kind: input, shape index: {}]
  %s3 = inlined_call_operand.vmem [shape: f32[1,128], index: 3, kind: input, shape index: {}]
  %s4 = inlined_call_operand.vmem [shape: f32[32,256], index: 4, kind: input, shape index: {}]
  %s5 = inlined_call_operand.vmem [shape: f32[1,256], index: 5, kind: input, shape index: {}]
  %s6 = inlined_call_operand.vmem [shape: f32[256,5], index: 6, kind: input, shape index: {}]
  %s7 = inlined_call_operand.vmem [shape: f32[1,5], index: 7, kind: input, shape index: {}]
  %s8 = inlined_call_operand.hbm [shape: f32[2,4], index: 8, kind: output, shape index: {}]
  %s9 = sld [smem:[#allocation0]]
  $region42: #{santa_fe_lstm_forward.1} parent=0
    _
  %s11 = ssub.s32 1, %s9
  %s12 = scalar_select 0, %s11, %s9
  $region1: #{santa_fe_lstm_forward.1} parent=0
    #allocation2 [shape = 'u8[1024]{0}', space=vmem, size = 0x400, scoped, tag = 'output window, operand 0, single buffered']
    #allocation3 [shape = 's32[1]{0}', space=sflag, size = 0x4, scoped, tag = 'scoped memory for santa_fe_lstm_forward.1']
    %13 = vsyncpa [#allocation3], 0
    // Predicated region
    $region2: #{santa_fe_lstm_forward.1} parent=1 // pred_check
      _
    $region3: #{santa_fe_lstm_forward.1} parent=1 // pred_check_branch
      %15 = sbr.rel (0) target = $region5
    $region4: #{santa_fe_lstm_forward.1} parent=1 // pred_region
      _
    $region5: #{santa_fe_lstm_forward.1} parent=1 // pred_fallthru
      _
    // Predicated region
    $region6: #{santa_fe_lstm_forward.1} parent=1 // pred_check
      _
    $region7: #{santa_fe_lstm_forward.1} parent=1 // pred_check_branch
      %17 = sbr.rel (0) target = $region9
    $region8: #{santa_fe_lstm_forward.1} parent=1 // pred_region
      _
    $region9: #{santa_fe_lstm_forward.1} parent=1 // pred_fallthru
      _
    // Predicated region
    $region10: #{santa_fe_lstm_forward.1} parent=1 // pred_check
      _
    $region11: #{santa_fe_lstm_forward.1} parent=1 // pred_check_branch
      %19 = sbr.rel (0) target = $region13
    $region12: #{santa_fe_lstm_forward.1} parent=1 // pred_region
      _
    $region13: #{santa_fe_lstm_forward.1} parent=1 // pred_fallthru
      _
    // Predicated region
    $region14: #{santa_fe_lstm_forward.1} parent=1 // pred_check
      _
    $region15: #{santa_fe_lstm_forward.1} parent=1 // pred_check_branch
      %21 = sbr.rel (0) target = $region17
    $region16: #{santa_fe_lstm_forward.1} parent=1 // pred_region
      _
    $region17: #{santa_fe_lstm_forward.1} parent=1 // pred_fallthru
      _
    // Predicated region
    $region18: #{santa_fe_lstm_forward.1} parent=1 // pred_check
      _
    $region19: #{santa_fe_lstm_forward.1} parent=1 // pred_check_branch
      %23 = sbr.rel (0) target = $region21
    $region20: #{santa_fe_lstm_forward.1} parent=1 // pred_region
      _
    $region21: #{santa_fe_lstm_forward.1} parent=1 // pred_fallthru
      _
    // Predicated region
    $region22: #{santa_fe_lstm_forward.1} parent=1 // pred_check
      _
    $region23: #{santa_fe_lstm_forward.1} parent=1 // pred_check_branch
      %25 = sbr.rel (0) target = $region25
    $region24: #{santa_fe_lstm_forward.1} parent=1 // pred_region
      _
    $region25: #{santa_fe_lstm_forward.1} parent=1 // pred_fallthru
      _
    // Predicated region
    $region26: #{santa_fe_lstm_forward.1} parent=1 // pred_check
      _
    $region27: #{santa_fe_lstm_forward.1} parent=1 // pred_check_branch
      %27 = sbr.rel (0) target = $region29
    $region28: #{santa_fe_lstm_forward.1} parent=1 // pred_region
      _
    $region29: #{santa_fe_lstm_forward.1} parent=1 // pred_fallthru
      _
    // Predicated region
    $region30: #{santa_fe_lstm_forward.1} parent=1 // pred_check
      _
    $region31: #{santa_fe_lstm_forward.1} parent=1 // pred_check_branch
      %29 = sbr.rel (0) target = $region33
    $region32: #{santa_fe_lstm_forward.1} parent=1 // pred_region
      _
    $region33: #{santa_fe_lstm_forward.1} parent=1 // pred_fallthru
      _
    %v30 = vld [vmem:[%s0] sm:$0xff]
    %v31 = vld [vmem:[%s0 + $0x8] sm:$0xff]
    %v32 = vld [vmem:[%s1] sm:$0xf]
    %v33 = vld [vmem:[%s3] sm:$0x1]
    %v35 = vperm.slane %v33, 0
    %vm37 = vcmask 31744
    %v39 = vsel %vm37, %v30, 0
    %v42 = vsel %vm37, %v31, 0
    %vm44 = vcmask 1043456
    %v46 = vsel %vm44, %v32, 0
    %48 = vmatpush.msra.mxu0 0.0
    %49 = vmatpush.msra.mxu0 0.0
    %50 = vmatpush.msra.mxu0 0.0
    %51 = vmatpush.msra.mxu0 0.0
    %52 = vmatpush.msra.mxu0 0.0
    %53 = vmatpush.msra.mxu0 0.0
    %54 = vmatpush.msra.mxu0 0.0
    %55 = vmatpush.msra.mxu0 0.0
    %56 = vmatpush.msra.mxu0 0.0
    %57 = vmatpush.msra.mxu0 0.0
    %58 = vmatpush.msra.mxu0 0.0
    %59 = vmatpush.msra.mxu0 0.0
    %60 = vmatpush.msra.mxu0 0.0
    %61 = vmatpush.msra.mxu0 0.0
    %62 = vmatpush.msra.mxu0 0.0
    %63 = vmatpush.msra.mxu0 %v46
    %64 = vmatmul.f32.gmra.mxu0 %v39
    %v65 = vpop.f32.mrf.mxu0
    %v66 = vadd.f32 %v35, %v65
    %67 = vmatmul.f32.gmra.mxu0 %v42
    %v68 = vpop.f32.mrf.mxu0
    %v69 = vadd.f32 %v35, %v68
    %70 = vdwg.mxu0
    %v71 = vld [vmem:[%s2] sm:$0xff]
    %v72 = vld [vmem:[%s2 + $0x8] sm:$0xff]
    %v73 = vld [vmem:[%s2 + $0x10] sm:$0xff]
    %v74 = vld [vmem:[%s2 + $0x18] sm:$0xff]
    %vm75 = vcmask 261120
    %v77 = vsel %vm75, 0.0, 0
    %79 = vmatpush.msra.mxu0 0.0
    %80 = vmatpush.msra.mxu0 0.0
    %81 = vmatpush.msra.mxu0 0.0
    %82 = vmatpush.msra.mxu0 0.0
    %83 = vmatpush.msra.mxu0 0.0
    %84 = vmatpush.msra.mxu0 0.0
    %85 = vmatpush.msra.mxu0 0.0
    %86 = vmatpush.msra.mxu0 0.0
    %87 = vmatpush.msra.mxu0 0.0
    %88 = vmatpush.msra.mxu0 0.0
    %89 = vmatpush.msra.mxu0 0.0
    %90 = vmatpush.msra.mxu0 0.0
    %91 = vmatpush.msra.mxu0 %v74
    %92 = vmatpush.msra.mxu0 %v73
    %93 = vmatpush.msra.mxu0 %v72
    %94 = vmatpush.msra.mxu0 %v71
    %95 = vmatmul.f32.gmra.mxu0 %v77
    %v96 = vpop.f32.mrf.mxu0
    %v97 = vadd.f32 0.0, %v96
    %98 = vdwg.mxu0
    %v100 = vrot.slane %v97, 1
    %v103 = vadd.f32 %v66, %v97
    %v104 = vadd.f32 %v69, %v100
    %v105 = vxor.u32 %v103, 2147483648
    %v106 = vxor.u32 %v104, 2147483648
    %v107 = vmul.f32 %v105, 1.442695
    %v108 = vpow.pop %v107
    %v109 = vmul.f32 %v106, 1.442695
    %v110 = vpow.pop %v109
    %v111 = vadd.f32 %v108, 1.0
    %v112 = vadd.f32 %v110, 1.0
    %v113 = vrcp.pop %v111
    %v114 = vmul.f32 %v111, %v113
    %v115 = vsub.f32 1.0, %v114
    %v116 = vmul.f32 %v113, %v115
    %v117 = vadd.f32 %v113, %v116
    %vm118 = vweird.f32 %v111
    %vm119 = vweird.f32 %v113
    %vm120 = vmor %vm118, %vm119
    %v121 = vsel %vm120, %v113, %v117
    %v122 = vand.u32 2147483647, %v111
    %vm123 = vcmp.eq.f32.partialorder %v122, 8.507059e+37
    %v124 = vand.u32 %v111, 2147483648
    %v125 = vor.u32 1.1754944e-38, %v124
    %v126 = vsel %vm123, %v125, %v121
    %v127 = vmul.f32 1.0, %v126
    %v128 = vrcp.pop %v112
    %v129 = vmul.f32 %v112, %v128
    %v130 = vsub.f32 1.0, %v129
    %v131 = vmul.f32 %v128, %v130
    %v132 = vadd.f32 %v128, %v131
    %vm133 = vweird.f32 %v112
    %vm134 = vweird.f32 %v128
    %vm135 = vmor %vm133, %vm134
    %v136 = vsel %vm135, %v128, %v132
    %v137 = vand.u32 2147483647, %v112
    %vm138 = vcmp.eq.f32.partialorder %v137, 8.507059e+37
    %v139 = vand.u32 %v112, 2147483648
    %v140 = vor.u32 1.1754944e-38, %v139
    %v141 = vsel %vm138, %v140, %v136
    %v142 = vmul.f32 1.0, %v141
    %v143 = vtanh.pop %v103
    %v144 = vtanh.pop %v104
    %v145 = vmul.f32 %v127, 0.0
    %v146 = vmul.f32 %v142, 0.0
    %149 = vrot.lane.b32.xlu0 %v143, 64
    %v150 = vpop.permute.xlu0 %149
    %151 = vrot.lane.b32.xlu0 %v144, 64
    %v152 = vpop.permute.xlu0 %151
    %v155 = vmul.f32 %v127, %v150
    %v156 = vmul.f32 %v142, %v152
    %159 = vrot.lane.b32.xlu0 %v155, 32
    %v160 = vpop.permute.xlu0 %159
    %161 = vrot.lane.b32.xlu0 %v156, 32
    %v162 = vpop.permute.xlu0 %161
    %v165 = vadd.f32 %v145, %v160
    %v166 = vadd.f32 %v146, %v162
    %v167 = vtanh.pop %v165
    %v168 = vtanh.pop %v166
    %171 = vrot.lane.b32.xlu0 %v167, 64
    %v172 = vpop.permute.xlu0 %171
    %173 = vrot.lane.b32.xlu0 %v168, 64
    %v174 = vpop.permute.xlu0 %173
    %v177 = vmul.f32 %v127, %v172
    %v178 = vmul.f32 %v142, %v174
    %v181 = vrot.slane %v178, 7
    %vm182 = vcmask 1041409
    %v183 = vsel %vm182, %v181, %v177
    %184 = vrot.lane.b32.xlu0 %v183, 32
    %v185 = vpop.permute.xlu0 %184
    %v186 = vsel %vm75, %v185, 0
    %188 = vmatpush.msra.mxu0 0.0
    %189 = vmatpush.msra.mxu0 0.0
    %190 = vmatpush.msra.mxu0 0.0
    %191 = vmatpush.msra.mxu0 0.0
    %192 = vmatpush.msra.mxu0 0.0
    %193 = vmatpush.msra.mxu0 0.0
    %194 = vmatpush.msra.mxu0 0.0
    %195 = vmatpush.msra.mxu0 0.0
    %196 = vmatpush.msra.mxu0 0.0
    %197 = vmatpush.msra.mxu0 0.0
    %198 = vmatpush.msra.mxu0 0.0
    %199 = vmatpush.msra.mxu0 0.0
    %200 = vmatpush.msra.mxu0 %v74
    %201 = vmatpush.msra.mxu0 %v73
    %202 = vmatpush.msra.mxu0 %v72
    %203 = vmatpush.msra.mxu0 %v71
    %204 = vmatmul.f32.gmra.mxu0 %v186
    %v205 = vpop.f32.mrf.mxu0
    %v206 = vadd.f32 0.0, %v205
    %207 = vdwg.mxu0
    %v209 = vrot.slane %v206, 7
    %v212 = vadd.f32 %v66, %v209
    %v213 = vadd.f32 %v69, %v206
    %v214 = vxor.u32 %v212, 2147483648
    %v215 = vxor.u32 %v213, 2147483648
    %v216 = vmul.f32 %v214, 1.442695
    %v217 = vpow.pop %v216
    %v218 = vmul.f32 %v215, 1.442695
    %v219 = vpow.pop %v218
    %v220 = vadd.f32 %v217, 1.0
    %v221 = vadd.f32 %v219, 1.0
    %v222 = vrcp.pop %v220
    %v223 = vmul.f32 %v220, %v222
    %v224 = vsub.f32 1.0, %v223
    %v225 = vmul.f32 %v222, %v224
    %v226 = vadd.f32 %v222, %v225
    %vm227 = vweird.f32 %v220
    %vm228 = vweird.f32 %v222
    %vm229 = vmor %vm227, %vm228
    %v230 = vsel %vm229, %v222, %v226
    %v231 = vand.u32 2147483647, %v220
    %vm232 = vcmp.eq.f32.partialorder %v231, 8.507059e+37
    %v233 = vand.u32 %v220, 2147483648
    %v234 = vor.u32 1.1754944e-38, %v233
    %v235 = vsel %vm232, %v234, %v230
    %v236 = vmul.f32 1.0, %v235
    %v237 = vrcp.pop %v221
    %v238 = vmul.f32 %v221, %v237
    %v239 = vsub.f32 1.0, %v238
    %v240 = vmul.f32 %v237, %v239
    %v241 = vadd.f32 %v237, %v240
    %vm242 = vweird.f32 %v221
    %vm243 = vweird.f32 %v237
    %vm244 = vmor %vm242, %vm243
    %v245 = vsel %vm244, %v237, %v241
    %v246 = vand.u32 2147483647, %v221
    %vm247 = vcmp.eq.f32.partialorder %v246, 8.507059e+37
    %v248 = vand.u32 %v221, 2147483648
    %v249 = vor.u32 1.1754944e-38, %v248
    %v250 = vsel %vm247, %v249, %v245
    %v251 = vmul.f32 1.0, %v250
    %v252 = vtanh.pop %v212
    %v253 = vtanh.pop %v213
    %v256 = vrot.slane %v165, 7
    %v257 = vrot.slane %v166, 7
    %v260 = vmul.f32 %v236, %v256
    %v261 = vmul.f32 %v251, %v257
    %264 = vrot.lane.b32.xlu0 %v252, 64
    %v265 = vpop.permute.xlu0 %264
    %266 = vrot.lane.b32.xlu0 %v253, 64
    %v267 = vpop.permute.xlu0 %266
    %v270 = vmul.f32 %v236, %v265
    %v271 = vmul.f32 %v251, %v267
    %274 = vrot.lane.b32.xlu0 %v270, 32
    %v275 = vpop.permute.xlu0 %274
    %276 = vrot.lane.b32.xlu0 %v271, 32
    %v277 = vpop.permute.xlu0 %276
    %v280 = vadd.f32 %v260, %v275
    %v281 = vadd.f32 %v261, %v277
    %v282 = vtanh.pop %v280
    %v283 = vtanh.pop %v281
    %286 = vrot.lane.b32.xlu0 %v282, 64
    %v287 = vpop.permute.xlu0 %286
    %288 = vrot.lane.b32.xlu0 %v283, 64
    %v289 = vpop.permute.xlu0 %288
    %v292 = vmul.f32 %v236, %v287
    %v293 = vmul.f32 %v251, %v289
    %v296 = vrot.slane %v292, 1
    %v297 = vsel %vm182, %v293, %v296
    %298 = vrot.lane.b32.xlu0 %v297, 32
    %v299 = vpop.permute.xlu0 %298
    %v300 = vsel %vm75, %v299, 0
    %302 = vmatpush.msra.mxu0 0.0
    %303 = vmatpush.msra.mxu0 0.0
    %304 = vmatpush.msra.mxu0 0.0
    %305 = vmatpush.msra.mxu0 0.0
    %306 = vmatpush.msra.mxu0 0.0
    %307 = vmatpush.msra.mxu0 0.0
    %308 = vmatpush.msra.mxu0 0.0
    %309 = vmatpush.msra.mxu0 0.0
    %310 = vmatpush.msra.mxu0 0.0
    %311 = vmatpush.msra.mxu0 0.0
    %312 = vmatpush.msra.mxu0 0.0
    %313 = vmatpush.msra.mxu0 0.0
    %314 = vmatpush.msra.mxu0 %v74
    %315 = vmatpush.msra.mxu0 %v73
    %316 = vmatpush.msra.mxu0 %v72
    %317 = vmatpush.msra.mxu0 %v71
    %318 = vmatmul.f32.gmra.mxu0 %v300
    %v319 = vpop.f32.mrf.mxu0
    %v320 = vadd.f32 0.0, %v319
    %321 = vdwg.mxu0
    %v323 = vrot.slane %v320, 6
    %v324 = vrot.slane %v320, 7
    %v327 = vadd.f32 %v66, %v323
    %v328 = vadd.f32 %v69, %v324
    %v329 = vxor.u32 %v327, 2147483648
    %v330 = vxor.u32 %v328, 2147483648
    %v331 = vmul.f32 %v329, 1.442695
    %v332 = vpow.pop %v331
    %v333 = vmul.f32 %v330, 1.442695
    %v334 = vpow.pop %v333
    %v335 = vadd.f32 %v332, 1.0
    %v336 = vadd.f32 %v334, 1.0
    %v337 = vrcp.pop %v335
    %v338 = vmul.f32 %v335, %v337
    %v339 = vsub.f32 1.0, %v338
    %v340 = vmul.f32 %v337, %v339
    %v341 = vadd.f32 %v337, %v340
    %vm342 = vweird.f32 %v335
    %vm343 = vweird.f32 %v337
    %vm344 = vmor %vm342, %vm343
    %v345 = vsel %vm344, %v337, %v341
    %v346 = vand.u32 2147483647, %v335
    %vm347 = vcmp.eq.f32.partialorder %v346, 8.507059e+37
    %v348 = vand.u32 %v335, 2147483648
    %v349 = vor.u32 1.1754944e-38, %v348
    %v350 = vsel %vm347, %v349, %v345
    %v351 = vmul.f32 1.0, %v350
    %v352 = vrcp.pop %v336
    %v353 = vmul.f32 %v336, %v352
    %v354 = vsub.f32 1.0, %v353
    %v355 = vmul.f32 %v352, %v354
    %v356 = vadd.f32 %v352, %v355
    %vm357 = vweird.f32 %v336
    %vm358 = vweird.f32 %v352
    %vm359 = vmor %vm357, %vm358
    %v360 = vsel %vm359, %v352, %v356
    %v361 = vand.u32 2147483647, %v336
    %vm362 = vcmp.eq.f32.partialorder %v361, 8.507059e+37
    %v363 = vand.u32 %v336, 2147483648
    %v364 = vor.u32 1.1754944e-38, %v363
    %v365 = vsel %vm362, %v364, %v360
    %v366 = vmul.f32 1.0, %v365
    %v367 = vtanh.pop %v327
    %v368 = vtanh.pop %v328
    %v371 = vrot.slane %v280, 7
    %v372 = vrot.slane %v281, 7
    %v375 = vmul.f32 %v351, %v371
    %v376 = vmul.f32 %v366, %v372
    %379 = vrot.lane.b32.xlu0 %v367, 64
    %v380 = vpop.permute.xlu0 %379
    %381 = vrot.lane.b32.xlu0 %v368, 64
    %v382 = vpop.permute.xlu0 %381
    %v385 = vmul.f32 %v351, %v380
    %v386 = vmul.f32 %v366, %v382
    %389 = vrot.lane.b32.xlu0 %v385, 32
    %v390 = vpop.permute.xlu0 %389
    %391 = vrot.lane.b32.xlu0 %v386, 32
    %v392 = vpop.permute.xlu0 %391
    %v395 = vadd.f32 %v375, %v390
    %v396 = vadd.f32 %v376, %v392
    %v397 = vtanh.pop %v395
    %v398 = vtanh.pop %v396
    %401 = vrot.lane.b32.xlu0 %v397, 64
    %v402 = vpop.permute.xlu0 %401
    %403 = vrot.lane.b32.xlu0 %v398, 64
    %v404 = vpop.permute.xlu0 %403
    %v407 = vmul.f32 %v351, %v402
    %v408 = vmul.f32 %v366, %v404
    %v411 = vrot.slane %v407, 2
    %v412 = vrot.slane %v408, 1
    %v413 = vsel %vm182, %v412, %v411
    %414 = vrot.lane.b32.xlu0 %v413, 32
    %v415 = vpop.permute.xlu0 %414
    %v416 = vsel %vm75, %v415, 0
    %418 = vmatpush.msra.mxu0 0.0
    %419 = vmatpush.msra.mxu0 0.0
    %420 = vmatpush.msra.mxu0 0.0
    %421 = vmatpush.msra.mxu0 0.0
    %422 = vmatpush.msra.mxu0 0.0
    %423 = vmatpush.msra.mxu0 0.0
    %424 = vmatpush.msra.mxu0 0.0
    %425 = vmatpush.msra.mxu0 0.0
    %426 = vmatpush.msra.mxu0 0.0
    %427 = vmatpush.msra.mxu0 0.0
    %428 = vmatpush.msra.mxu0 0.0
    %429 = vmatpush.msra.mxu0 0.0
    %430 = vmatpush.msra.mxu0 %v74
    %431 = vmatpush.msra.mxu0 %v73
    %432 = vmatpush.msra.mxu0 %v72
    %433 = vmatpush.msra.mxu0 %v71
    %434 = vmatmul.f32.gmra.mxu0 %v416
    %v435 = vpop.f32.mrf.mxu0
    %v436 = vadd.f32 0.0, %v435
    %437 = vdwg.mxu0
    %v439 = vrot.slane %v436, 5
    %v440 = vrot.slane %v436, 6
    %v443 = vadd.f32 %v66, %v439
    %v444 = vadd.f32 %v69, %v440
    %v445 = vxor.u32 %v443, 2147483648
    %v446 = vxor.u32 %v444, 2147483648
    %v447 = vmul.f32 %v445, 1.442695
    %v448 = vpow.pop %v447
    %v449 = vmul.f32 %v446, 1.442695
    %v450 = vpow.pop %v449
    %v451 = vadd.f32 %v448, 1.0
    %v452 = vadd.f32 %v450, 1.0
    %v453 = vrcp.pop %v451
    %v454 = vmul.f32 %v451, %v453
    %v455 = vsub.f32 1.0, %v454
    %v456 = vmul.f32 %v453, %v455
    %v457 = vadd.f32 %v453, %v456
    %vm458 = vweird.f32 %v451
    %vm459 = vweird.f32 %v453
    %vm460 = vmor %vm458, %vm459
    %v461 = vsel %vm460, %v453, %v457
    %v462 = vand.u32 2147483647, %v451
    %vm463 = vcmp.eq.f32.partialorder %v462, 8.507059e+37
    %v464 = vand.u32 %v451, 2147483648
    %v465 = vor.u32 1.1754944e-38, %v464
    %v466 = vsel %vm463, %v465, %v461
    %v467 = vmul.f32 1.0, %v466
    %v468 = vrcp.pop %v452
    %v469 = vmul.f32 %v452, %v468
    %v470 = vsub.f32 1.0, %v469
    %v471 = vmul.f32 %v468, %v470
    %v472 = vadd.f32 %v468, %v471
    %vm473 = vweird.f32 %v452
    %vm474 = vweird.f32 %v468
    %vm475 = vmor %vm473, %vm474
    %v476 = vsel %vm475, %v468, %v472
    %v477 = vand.u32 2147483647, %v452
    %vm478 = vcmp.eq.f32.partialorder %v477, 8.507059e+37
    %v479 = vand.u32 %v452, 2147483648
    %v480 = vor.u32 1.1754944e-38, %v479
    %v481 = vsel %vm478, %v480, %v476
    %v482 = vmul.f32 1.0, %v481
    %v483 = vtanh.pop %v443
    %v484 = vtanh.pop %v444
    %v487 = vrot.slane %v395, 7
    %v488 = vrot.slane %v396, 7
    %v491 = vmul.f32 %v467, %v487
    %v492 = vmul.f32 %v482, %v488
    %495 = vrot.lane.b32.xlu0 %v483, 64
    %v496 = vpop.permute.xlu0 %495
    %497 = vrot.lane.b32.xlu0 %v484, 64
    %v498 = vpop.permute.xlu0 %497
    %v501 = vmul.f32 %v467, %v496
    %v502 = vmul.f32 %v482, %v498
    %505 = vrot.lane.b32.xlu0 %v501, 32
    %v506 = vpop.permute.xlu0 %505
    %507 = vrot.lane.b32.xlu0 %v502, 32
    %v508 = vpop.permute.xlu0 %507
    %v511 = vadd.f32 %v491, %v506
    %v512 = vadd.f32 %v492, %v508
    %v513 = vtanh.pop %v511
    %v514 = vtanh.pop %v512
    %517 = vrot.lane.b32.xlu0 %v513, 64
    %v518 = vpop.permute.xlu0 %517
    %519 = vrot.lane.b32.xlu0 %v514, 64
    %v520 = vpop.permute.xlu0 %519
    %v523 = vmul.f32 %v467, %v518
    %v524 = vmul.f32 %v482, %v520
    %v527 = vrot.slane %v523, 3
    %v528 = vrot.slane %v524, 2
    %v529 = vsel %vm182, %v528, %v527
    %530 = vrot.lane.b32.xlu0 %v529, 32
    %v531 = vpop.permute.xlu0 %530
    %v532 = vsel %vm75, %v531, 0
    %534 = vmatpush.msra.mxu0 0.0
    %535 = vmatpush.msra.mxu0 0.0
    %536 = vmatpush.msra.mxu0 0.0
    %537 = vmatpush.msra.mxu0 0.0
    %538 = vmatpush.msra.mxu0 0.0
    %539 = vmatpush.msra.mxu0 0.0
    %540 = vmatpush.msra.mxu0 0.0
    %541 = vmatpush.msra.mxu0 0.0
    %542 = vmatpush.msra.mxu0 0.0
    %543 = vmatpush.msra.mxu0 0.0
    %544 = vmatpush.msra.mxu0 0.0
    %545 = vmatpush.msra.mxu0 0.0
    %546 = vmatpush.msra.mxu0 %v74
    %547 = vmatpush.msra.mxu0 %v73
    %548 = vmatpush.msra.mxu0 %v72
    %549 = vmatpush.msra.mxu0 %v71
    %550 = vmatmul.f32.gmra.mxu0 %v532
    %v551 = vpop.f32.mrf.mxu0
    %v552 = vadd.f32 0.0, %v551
    %553 = vdwg.mxu0
    %v555 = vrot.slane %v552, 4
    %v556 = vrot.slane %v552, 5
    %v559 = vadd.f32 %v66, %v555
    %v560 = vadd.f32 %v69, %v556
    %v561 = vxor.u32 %v559, 2147483648
    %v562 = vxor.u32 %v560, 2147483648
    %v563 = vmul.f32 %v561, 1.442695
    %v564 = vpow.pop %v563
    %v565 = vmul.f32 %v562, 1.442695
    %v566 = vpow.pop %v565
    %v567 = vadd.f32 %v564, 1.0
    %v568 = vadd.f32 %v566, 1.0
    %v569 = vrcp.pop %v567
    %v570 = vmul.f32 %v567, %v569
    %v571 = vsub.f32 1.0, %v570
    %v572 = vmul.f32 %v569, %v571
    %v573 = vadd.f32 %v569, %v572
    %vm574 = vweird.f32 %v567
    %vm575 = vweird.f32 %v569
    %vm576 = vmor %vm574, %vm575
    %v577 = vsel %vm576, %v569, %v573
    %v578 = vand.u32 2147483647, %v567
    %vm579 = vcmp.eq.f32.partialorder %v578, 8.507059e+37
    %v580 = vand.u32 %v567, 2147483648
    %v581 = vor.u32 1.1754944e-38, %v580
    %v582 = vsel %vm579, %v581, %v577
    %v583 = vmul.f32 1.0, %v582
    %v584 = vrcp.pop %v568
    %v585 = vmul.f32 %v568, %v584
    %v586 = vsub.f32 1.0, %v585
    %v587 = vmul.f32 %v584, %v586
    %v588 = vadd.f32 %v584, %v587
    %vm589 = vweird.f32 %v568
    %vm590 = vweird.f32 %v584
    %vm591 = vmor %vm589, %vm590
    %v592 = vsel %vm591, %v584, %v588
    %v593 = vand.u32 2147483647, %v568
    %vm594 = vcmp.eq.f32.partialorder %v593, 8.507059e+37
    %v595 = vand.u32 %v568, 2147483648
    %v596 = vor.u32 1.1754944e-38, %v595
    %v597 = vsel %vm594, %v596, %v592
    %v598 = vmul.f32 1.0, %v597
    %v599 = vtanh.pop %v559
    %v600 = vtanh.pop %v560
    %v603 = vrot.slane %v511, 7
    %v604 = vrot.slane %v512, 7
    %v607 = vmul.f32 %v583, %v603
    %v608 = vmul.f32 %v598, %v604
    %611 = vrot.lane.b32.xlu0 %v599, 64
    %v612 = vpop.permute.xlu0 %611
    %613 = vrot.lane.b32.xlu0 %v600, 64
    %v614 = vpop.permute.xlu0 %613
    %v617 = vmul.f32 %v583, %v612
    %v618 = vmul.f32 %v598, %v614
    %621 = vrot.lane.b32.xlu0 %v617, 32
    %v622 = vpop.permute.xlu0 %621
    %623 = vrot.lane.b32.xlu0 %v618, 32
    %v624 = vpop.permute.xlu0 %623
    %v627 = vadd.f32 %v607, %v622
    %v628 = vadd.f32 %v608, %v624
    %v629 = vtanh.pop %v627
    %v630 = vtanh.pop %v628
    %633 = vrot.lane.b32.xlu0 %v629, 64
    %v634 = vpop.permute.xlu0 %633
    %635 = vrot.lane.b32.xlu0 %v630, 64
    %v636 = vpop.permute.xlu0 %635
    %v639 = vmul.f32 %v583, %v634
    %v640 = vmul.f32 %v598, %v636
    %v643 = vrot.slane %v639, 4
    %v644 = vrot.slane %v640, 3
    %v645 = vsel %vm182, %v644, %v643
    %646 = vrot.lane.b32.xlu0 %v645, 32
    %v647 = vpop.permute.xlu0 %646
    %v648 = vsel %vm75, %v647, 0
    %650 = vmatpush.msra.mxu0 0.0
    %651 = vmatpush.msra.mxu0 0.0
    %652 = vmatpush.msra.mxu0 0.0
    %653 = vmatpush.msra.mxu0 0.0
    %654 = vmatpush.msra.mxu0 0.0
    %655 = vmatpush.msra.mxu0 0.0
    %656 = vmatpush.msra.mxu0 0.0
    %657 = vmatpush.msra.mxu0 0.0
    %658 = vmatpush.msra.mxu0 0.0
    %659 = vmatpush.msra.mxu0 0.0
    %660 = vmatpush.msra.mxu0 0.0
    %661 = vmatpush.msra.mxu0 0.0
    %662 = vmatpush.msra.mxu0 %v74
    %663 = vmatpush.msra.mxu0 %v73
    %664 = vmatpush.msra.mxu0 %v72
    %665 = vmatpush.msra.mxu0 %v71
    %666 = vmatmul.f32.gmra.mxu0 %v648
    %v667 = vpop.f32.mrf.mxu0
    %v668 = vadd.f32 0.0, %v667
    %669 = vdwg.mxu0
    %v671 = vrot.slane %v668, 3
    %v672 = vrot.slane %v668, 4
    %v675 = vadd.f32 %v66, %v671
    %v676 = vadd.f32 %v69, %v672
    %v677 = vxor.u32 %v675, 2147483648
    %v678 = vxor.u32 %v676, 2147483648
    %v679 = vmul.f32 %v677, 1.442695
    %v680 = vpow.pop %v679
    %v681 = vmul.f32 %v678, 1.442695
    %v682 = vpow.pop %v681
    %v683 = vadd.f32 %v680, 1.0
    %v684 = vadd.f32 %v682, 1.0
    %v685 = vrcp.pop %v683
    %v686 = vmul.f32 %v683, %v685
    %v687 = vsub.f32 1.0, %v686
    %v688 = vmul.f32 %v685, %v687
    %v689 = vadd.f32 %v685, %v688
    %vm690 = vweird.f32 %v683
    %vm691 = vweird.f32 %v685
    %vm692 = vmor %vm690, %vm691
    %v693 = vsel %vm692, %v685, %v689
    %v694 = vand.u32 2147483647, %v683
    %vm695 = vcmp.eq.f32.partialorder %v694, 8.507059e+37
    %v696 = vand.u32 %v683, 2147483648
    %v697 = vor.u32 1.1754944e-38, %v696
    %v698 = vsel %vm695, %v697, %v693
    %v699 = vmul.f32 1.0, %v698
    %v700 = vrcp.pop %v684
    %v701 = vmul.f32 %v684, %v700
    %v702 = vsub.f32 1.0, %v701
    %v703 = vmul.f32 %v700, %v702
    %v704 = vadd.f32 %v700, %v703
    %vm705 = vweird.f32 %v684
    %vm706 = vweird.f32 %v700
    %vm707 = vmor %vm705, %vm706
    %v708 = vsel %vm707, %v700, %v704
    %v709 = vand.u32 2147483647, %v684
    %vm710 = vcmp.eq.f32.partialorder %v709, 8.507059e+37
    %v711 = vand.u32 %v684, 2147483648
    %v712 = vor.u32 1.1754944e-38, %v711
    %v713 = vsel %vm710, %v712, %v708
    %v714 = vmul.f32 1.0, %v713
    %v715 = vtanh.pop %v675
    %v716 = vtanh.pop %v676
    %v719 = vrot.slane %v627, 7
    %v720 = vrot.slane %v628, 7
    %v723 = vmul.f32 %v699, %v719
    %v724 = vmul.f32 %v714, %v720
    %727 = vrot.lane.b32.xlu0 %v715, 64
    %v728 = vpop.permute.xlu0 %727
    %729 = vrot.lane.b32.xlu0 %v716, 64
    %v730 = vpop.permute.xlu0 %729
    %v733 = vmul.f32 %v699, %v728
    %v734 = vmul.f32 %v714, %v730
    %737 = vrot.lane.b32.xlu0 %v733, 32
    %v738 = vpop.permute.xlu0 %737
    %739 = vrot.lane.b32.xlu0 %v734, 32
    %v740 = vpop.permute.xlu0 %739
    %v743 = vadd.f32 %v723, %v738
    %v744 = vadd.f32 %v724, %v740
    %v745 = vtanh.pop %v743
    %v746 = vtanh.pop %v744
    %749 = vrot.lane.b32.xlu0 %v745, 64
    %v750 = vpop.permute.xlu0 %749
    %751 = vrot.lane.b32.xlu0 %v746, 64
    %v752 = vpop.permute.xlu0 %751
    %v755 = vmul.f32 %v699, %v750
    %v756 = vmul.f32 %v714, %v752
    %v759 = vrot.slane %v755, 5
    %v760 = vrot.slane %v756, 4
    %v761 = vsel %vm182, %v760, %v759
    %762 = vrot.lane.b32.xlu0 %v761, 32
    %v763 = vpop.permute.xlu0 %762
    %v764 = vsel %vm75, %v763, 0
    %766 = vmatpush.msra.mxu0 0.0
    %767 = vmatpush.msra.mxu0 0.0
    %768 = vmatpush.msra.mxu0 0.0
    %769 = vmatpush.msra.mxu0 0.0
    %770 = vmatpush.msra.mxu0 0.0
    %771 = vmatpush.msra.mxu0 0.0
    %772 = vmatpush.msra.mxu0 0.0
    %773 = vmatpush.msra.mxu0 0.0
    %774 = vmatpush.msra.mxu0 0.0
    %775 = vmatpush.msra.mxu0 0.0
    %776 = vmatpush.msra.mxu0 0.0
    %777 = vmatpush.msra.mxu0 0.0
    %778 = vmatpush.msra.mxu0 %v74
    %779 = vmatpush.msra.mxu0 %v73
    %780 = vmatpush.msra.mxu0 %v72
    %781 = vmatpush.msra.mxu0 %v71
    %782 = vmatmul.f32.gmra.mxu0 %v764
    %v783 = vpop.f32.mrf.mxu0
    %v784 = vadd.f32 0.0, %v783
    %785 = vdwg.mxu0
    %v787 = vrot.slane %v784, 2
    %v788 = vrot.slane %v784, 3
    %v791 = vadd.f32 %v66, %v787
    %v792 = vadd.f32 %v69, %v788
    %v793 = vxor.u32 %v791, 2147483648
    %v794 = vxor.u32 %v792, 2147483648
    %v795 = vmul.f32 %v793, 1.442695
    %v796 = vpow.pop %v795
    %v797 = vmul.f32 %v794, 1.442695
    %v798 = vpow.pop %v797
    %v799 = vadd.f32 %v796, 1.0
    %v800 = vadd.f32 %v798, 1.0
    %v801 = vrcp.pop %v799
    %v802 = vmul.f32 %v799, %v801
    %v803 = vsub.f32 1.0, %v802
    %v804 = vmul.f32 %v801, %v803
    %v805 = vadd.f32 %v801, %v804
    %vm806 = vweird.f32 %v799
    %vm807 = vweird.f32 %v801
    %vm808 = vmor %vm806, %vm807
    %v809 = vsel %vm808, %v801, %v805
    %v810 = vand.u32 2147483647, %v799
    %vm811 = vcmp.eq.f32.partialorder %v810, 8.507059e+37
    %v812 = vand.u32 %v799, 2147483648
    %v813 = vor.u32 1.1754944e-38, %v812
    %v814 = vsel %vm811, %v813, %v809
    %v815 = vmul.f32 1.0, %v814
    %v816 = vrcp.pop %v800
    %v817 = vmul.f32 %v800, %v816
    %v818 = vsub.f32 1.0, %v817
    %v819 = vmul.f32 %v816, %v818
    %v820 = vadd.f32 %v816, %v819
    %vm821 = vweird.f32 %v800
    %vm822 = vweird.f32 %v816
    %vm823 = vmor %vm821, %vm822
    %v824 = vsel %vm823, %v816, %v820
    %v825 = vand.u32 2147483647, %v800
    %vm826 = vcmp.eq.f32.partialorder %v825, 8.507059e+37
    %v827 = vand.u32 %v800, 2147483648
    %v828 = vor.u32 1.1754944e-38, %v827
    %v829 = vsel %vm826, %v828, %v824
    %v830 = vmul.f32 1.0, %v829
    %v831 = vtanh.pop %v791
    %v832 = vtanh.pop %v792
    %v835 = vrot.slane %v743, 7
    %v836 = vrot.slane %v744, 7
    %v839 = vmul.f32 %v815, %v835
    %v840 = vmul.f32 %v830, %v836
    %843 = vrot.lane.b32.xlu0 %v831, 64
    %v844 = vpop.permute.xlu0 %843
    %845 = vrot.lane.b32.xlu0 %v832, 64
    %v846 = vpop.permute.xlu0 %845
    %v849 = vmul.f32 %v815, %v844
    %v850 = vmul.f32 %v830, %v846
    %853 = vrot.lane.b32.xlu0 %v849, 32
    %v854 = vpop.permute.xlu0 %853
    %855 = vrot.lane.b32.xlu0 %v850, 32
    %v856 = vpop.permute.xlu0 %855
    %v859 = vadd.f32 %v839, %v854
    %v860 = vadd.f32 %v840, %v856
    %v861 = vtanh.pop %v859
    %v862 = vtanh.pop %v860
    %865 = vrot.lane.b32.xlu0 %v861, 64
    %v866 = vpop.permute.xlu0 %865
    %867 = vrot.lane.b32.xlu0 %v862, 64
    %v868 = vpop.permute.xlu0 %867
    %v871 = vmul.f32 %v815, %v866
    %v872 = vmul.f32 %v830, %v868
    %v875 = vrot.slane %v871, 6
    %v876 = vrot.slane %v872, 5
    %v877 = vsel %vm182, %v876, %v875
    %878 = vrot.lane.b32.xlu0 %v877, 32
    %v879 = vpop.permute.xlu0 %878
    %v880 = vsel %vm75, %v879, 0
    %882 = vmatpush.msra.mxu0 0.0
    %883 = vmatpush.msra.mxu0 0.0
    %884 = vmatpush.msra.mxu0 0.0
    %885 = vmatpush.msra.mxu0 0.0
    %886 = vmatpush.msra.mxu0 0.0
    %887 = vmatpush.msra.mxu0 0.0
    %888 = vmatpush.msra.mxu0 0.0
    %889 = vmatpush.msra.mxu0 0.0
    %890 = vmatpush.msra.mxu0 0.0
    %891 = vmatpush.msra.mxu0 0.0
    %892 = vmatpush.msra.mxu0 0.0
    %893 = vmatpush.msra.mxu0 0.0
    %894 = vmatpush.msra.mxu0 %v74
    %895 = vmatpush.msra.mxu0 %v73
    %896 = vmatpush.msra.mxu0 %v72
    %897 = vmatpush.msra.mxu0 %v71
    %898 = vmatmul.f32.gmra.mxu0 %v880
    %v899 = vpop.f32.mrf.mxu0
    %v900 = vadd.f32 0.0, %v899
    %901 = vdwg.mxu0
    %v903 = vrot.slane %v900, 1
    %v904 = vrot.slane %v900, 2
    %v907 = vadd.f32 %v66, %v903
    %v908 = vadd.f32 %v69, %v904
    %v909 = vxor.u32 %v907, 2147483648
    %v910 = vxor.u32 %v908, 2147483648
    %v911 = vmul.f32 %v909, 1.442695
    %v912 = vpow.pop %v911
    %v913 = vmul.f32 %v910, 1.442695
    %v914 = vpow.pop %v913
    %v915 = vadd.f32 %v912, 1.0
    %v916 = vadd.f32 %v914, 1.0
    %v917 = vrcp.pop %v915
    %v918 = vmul.f32 %v915, %v917
    %v919 = vsub.f32 1.0, %v918
    %v920 = vmul.f32 %v917, %v919
    %v921 = vadd.f32 %v917, %v920
    %vm922 = vweird.f32 %v915
    %vm923 = vweird.f32 %v917
    %vm924 = vmor %vm922, %vm923
    %v925 = vsel %vm924, %v917, %v921
    %v926 = vand.u32 2147483647, %v915
    %vm927 = vcmp.eq.f32.partialorder %v926, 8.507059e+37
    %v928 = vand.u32 %v915, 2147483648
    %v929 = vor.u32 1.1754944e-38, %v928
    %v930 = vsel %vm927, %v929, %v925
    %v931 = vmul.f32 1.0, %v930
    %v932 = vrcp.pop %v916
    %v933 = vmul.f32 %v916, %v932
    %v934 = vsub.f32 1.0, %v933
    %v935 = vmul.f32 %v932, %v934
    %v936 = vadd.f32 %v932, %v935
    %vm937 = vweird.f32 %v916
    %vm938 = vweird.f32 %v932
    %vm939 = vmor %vm937, %vm938
    %v940 = vsel %vm939, %v932, %v936
    %v941 = vand.u32 2147483647, %v916
    %vm942 = vcmp.eq.f32.partialorder %v941, 8.507059e+37
    %v943 = vand.u32 %v916, 2147483648
    %v944 = vor.u32 1.1754944e-38, %v943
    %v945 = vsel %vm942, %v944, %v940
    %v946 = vmul.f32 1.0, %v945
    %v947 = vtanh.pop %v907
    %v948 = vtanh.pop %v908
    %v951 = vrot.slane %v859, 7
    %v952 = vrot.slane %v860, 7
    %v955 = vmul.f32 %v931, %v951
    %v956 = vmul.f32 %v946, %v952
    %959 = vrot.lane.b32.xlu0 %v947, 64
    %v960 = vpop.permute.xlu0 %959
    %961 = vrot.lane.b32.xlu0 %v948, 64
    %v962 = vpop.permute.xlu0 %961
    %v965 = vmul.f32 %v931, %v960
    %v966 = vmul.f32 %v946, %v962
    %969 = vrot.lane.b32.xlu0 %v965, 32
    %v970 = vpop.permute.xlu0 %969
    %971 = vrot.lane.b32.xlu0 %v966, 32
    %v972 = vpop.permute.xlu0 %971
    %v975 = vadd.f32 %v955, %v970
    %v976 = vadd.f32 %v956, %v972
    %v977 = vtanh.pop %v975
    %v978 = vtanh.pop %v976
    %981 = vrot.lane.b32.xlu0 %v977, 64
    %v982 = vpop.permute.xlu0 %981
    %983 = vrot.lane.b32.xlu0 %v978, 64
    %v984 = vpop.permute.xlu0 %983
    %v987 = vmul.f32 %v931, %v982
    %v988 = vmul.f32 %v946, %v984
    %v989 = vld [vmem:[%s4] sm:$0xff]
    %v990 = vld [vmem:[%s4 + $0x8] sm:$0xff]
    %v991 = vld [vmem:[%s4 + $0x10] sm:$0xff]
    %v992 = vld [vmem:[%s4 + $0x18] sm:$0xff]
    %v993 = vld [vmem:[%s4 + $0x20] sm:$0xff]
    %v994 = vld [vmem:[%s4 + $0x28] sm:$0xff]
    %v995 = vld [vmem:[%s4 + $0x30] sm:$0xff]
    %v996 = vld [vmem:[%s4 + $0x38] sm:$0xff]
    %v997 = vld [vmem:[%s5] sm:$0x3]
    %v999 = vperm.slane %v997, 0
    %v1000 = vperm.slane %v997, 1
    %v1005 = vrot.slane %v987, 7
    %v1006 = vrot.slane %v988, 6
    %v1007 = vsel %vm182, %v1006, %v1005
    %1008 = vrot.lane.b32.xlu0 %v1007, 32
    %v1009 = vpop.permute.xlu0 %1008
    %v1010 = vsel %vm75, %v1009, 0
    %1012 = vmatpush.msra.mxu0 0.0
    %1013 = vmatpush.msra.mxu0 0.0
    %1014 = vmatpush.msra.mxu0 0.0
    %1015 = vmatpush.msra.mxu0 0.0
    %1016 = vmatpush.msra.mxu0 0.0
    %1017 = vmatpush.msra.mxu0 0.0
    %1018 = vmatpush.msra.mxu0 0.0
    %1019 = vmatpush.msra.mxu0 0.0
    %1020 = vmatpush.msra.mxu0 0.0
    %1021 = vmatpush.msra.mxu0 0.0
    %1022 = vmatpush.msra.mxu0 0.0
    %1023 = vmatpush.msra.mxu0 0.0
    %1024 = vmatpush.msra.mxu0 %v995
    %1025 = vmatpush.msra.mxu0 %v993
    %1026 = vmatpush.msra.mxu0 %v991
    %1027 = vmatpush.msra.mxu0 %v989
    %1028 = vmatmul.f32.gmra.mxu0 %v1010
    %v1029 = vpop.f32.mrf.mxu0
    %v1030 = vadd.f32 %v999, %v1029
    %1031 = vdwg.mxu0
    %1032 = vmatpush.msra.mxu0 0.0
    %1033 = vmatpush.msra.mxu0 0.0
    %1034 = vmatpush.msra.mxu0 0.0
    %1035 = vmatpush.msra.mxu0 0.0
    %1036 = vmatpush.msra.mxu0 0.0
    %1037 = vmatpush.msra.mxu0 0.0
    %1038 = vmatpush.msra.mxu0 0.0
    %1039 = vmatpush.msra.mxu0 0.0
    %1040 = vmatpush.msra.mxu0 0.0
    %1041 = vmatpush.msra.mxu0 0.0
    %1042 = vmatpush.msra.mxu0 0.0
    %1043 = vmatpush.msra.mxu0 0.0
    %1044 = vmatpush.msra.mxu0 %v996
    %1045 = vmatpush.msra.mxu0 %v994
    %1046 = vmatpush.msra.mxu0 %v992
    %1047 = vmatpush.msra.mxu0 %v990
    %1048 = vmatmul.f32.gmra.mxu0 %v1010
    %v1049 = vpop.f32.mrf.mxu0
    %v1050 = vadd.f32 %v1000, %v1049
    %1051 = vdwg.mxu0
    %v1052 = vmax.f32 %v1030, 0.0
    %v1053 = vmax.f32 %v1050, 0.0
    %v1054 = vld [vmem:[%s6] sm:$0xff]
    %v1055 = vld [vmem:[%s6 + $0x8] sm:$0xff]
    %v1056 = vld [vmem:[%s6 + $0x10] sm:$0xff]
    %v1057 = vld [vmem:[%s6 + $0x18] sm:$0xff]
    %v1058 = vld [vmem:[%s6 + $0x20] sm:$0xff]
    %v1059 = vld [vmem:[%s6 + $0x28] sm:$0xff]
    %v1060 = vld [vmem:[%s6 + $0x30] sm:$0xff]
    %v1061 = vld [vmem:[%s6 + $0x38] sm:$0xff]
    %v1062 = vld [vmem:[%s6 + $0x40] sm:$0xff]
    %v1063 = vld [vmem:[%s6 + $0x48] sm:$0xff]
    %v1064 = vld [vmem:[%s6 + $0x50] sm:$0xff]
    %v1065 = vld [vmem:[%s6 + $0x58] sm:$0xff]
    %v1066 = vld [vmem:[%s6 + $0x60] sm:$0xff]
    %v1067 = vld [vmem:[%s6 + $0x68] sm:$0xff]
    %v1068 = vld [vmem:[%s6 + $0x70] sm:$0xff]
    %v1069 = vld [vmem:[%s6 + $0x78] sm:$0xff]
    %v1070 = vld [vmem:[%s6 + $0x80] sm:$0xff]
    %v1071 = vld [vmem:[%s6 + $0x88] sm:$0xff]
    %v1072 = vld [vmem:[%s6 + $0x90] sm:$0xff]
    %v1073 = vld [vmem:[%s6 + $0x98] sm:$0xff]
    %v1074 = vld [vmem:[%s6 + $0xa0] sm:$0xff]
    %v1075 = vld [vmem:[%s6 + $0xa8] sm:$0xff]
    %v1076 = vld [vmem:[%s6 + $0xb0] sm:$0xff]
    %v1077 = vld [vmem:[%s6 + $0xb8] sm:$0xff]
    %v1078 = vld [vmem:[%s6 + $0xc0] sm:$0xff]
    %v1079 = vld [vmem:[%s6 + $0xc8] sm:$0xff]
    %v1080 = vld [vmem:[%s6 + $0xd0] sm:$0xff]
    %v1081 = vld [vmem:[%s6 + $0xd8] sm:$0xff]
    %v1082 = vld [vmem:[%s6 + $0xe0] sm:$0xff]
    %v1083 = vld [vmem:[%s6 + $0xe8] sm:$0xff]
    %v1084 = vld [vmem:[%s6 + $0xf0] sm:$0xff]
    %v1085 = vld [vmem:[%s6 + $0xf8] sm:$0xff]
    %v1086 = vld [vmem:[%s7] sm:$0x1]
    %v1088 = vperm.slane %v1086, 0
    %1090 = vmatpush.msra.mxu0 %v1069
    %1091 = vmatpush.msra.mxu0 %v1068
    %1092 = vmatpush.msra.mxu0 %v1067
    %1093 = vmatpush.msra.mxu0 %v1066
    %1094 = vmatpush.msra.mxu0 %v1065
    %1095 = vmatpush.msra.mxu0 %v1064
    %1096 = vmatpush.msra.mxu0 %v1063
    %1097 = vmatpush.msra.mxu0 %v1062
    %1098 = vmatpush.msra.mxu0 %v1061
    %1099 = vmatpush.msra.mxu0 %v1060
    %1100 = vmatpush.msra.mxu0 %v1059
    %1101 = vmatpush.msra.mxu0 %v1058
    %1102 = vmatpush.msra.mxu0 %v1057
    %1103 = vmatpush.msra.mxu0 %v1056
    %1104 = vmatpush.msra.mxu0 %v1055
    %1105 = vmatpush.msra.mxu0 %v1054
    %1106 = vmatmul.f32.gmra.mxu0 %v1052
    %v1107 = vpop.f32.mrf.mxu0
    %v1108 = vadd.f32 %v1088, %v1107
    %1109 = vdwg.mxu0
    %1110 = vmatpush.msra.mxu0 %v1085
    %1111 = vmatpush.msra.mxu0 %v1084
    %1112 = vmatpush.msra.mxu0 %v1083
    %1113 = vmatpush.msra.mxu0 %v1082
    %1114 = vmatpush.msra.mxu0 %v1081
    %1115 = vmatpush.msra.mxu0 %v1080
    %1116 = vmatpush.msra.mxu0 %v1079
    %1117 = vmatpush.msra.mxu0 %v1078
    %1118 = vmatpush.msra.mxu0 %v1077
    %1119 = vmatpush.msra.mxu0 %v1076
    %1120 = vmatpush.msra.mxu0 %v1075
    %1121 = vmatpush.msra.mxu0 %v1074
    %1122 = vmatpush.msra.mxu0 %v1073
    %1123 = vmatpush.msra.mxu0 %v1072
    %1124 = vmatpush.msra.mxu0 %v1071
    %1125 = vmatpush.msra.mxu0 %v1070
    %1126 = vmatmul.f32.gmra.mxu0 %v1053
    %v1127 = vpop.f32.mrf.mxu0
    %v1128 = vadd.f32 %v1108, %v1127
    %1129 = vdwg.mxu0
    %1131 = vrot.lane.b32.xlu0 %v1128, 127
    %v1132 = vpop.permute.xlu0 %1131
    %vm1134 = vcmask 25600
    %v1135 = vsel %vm1134, %v1132, 0.0
    %1136 = vadd.xlane.f32.xlu0 %v1135
    %v1137 = vpop.xlane.xlu0 %1136
    %v1138 = vrcp.pop 4.0
    %v1139 = vmul.f32 4.0, %v1138
    %v1140 = vsub.f32 1.0, %v1139
    %v1141 = vmul.f32 %v1138, %v1140
    %v1142 = vadd.f32 %v1138, %v1141
    %vm1143 = vweird.f32 %v1138
    %v1144 = vsel %vm1143, %v1138, %v1142
    %v1145 = vmul.f32 %v1137, %v1144
    %v1146 = vsub.f32 %v1128, %v1145
    %1147 = vset.pattern.permute.xlu0 0
    %1148 = vperm.xlu0 %1147, %v1128
    %v1149 = vpop.permute.xlu0 %1148
    %v1151 = vadd.f32 %v1149, %v1146
    %1153 = vrot.lane.b32.xlu0 %v1151, 127
    %v1154 = vpop.permute.xlu0 %1153
    %1156 = vst.msk [vmem:[#allocation2] sm:$0x3] %vm1134, %v1154
    // Predicated region
    $region34: #{santa_fe_lstm_forward.1} parent=1 // pred_check
      _
    $region35: #{santa_fe_lstm_forward.1} parent=1 // pred_check_branch
      %1158 = sbr.rel (0) target = $region37
    $region36: #{santa_fe_lstm_forward.1} parent=1 // pred_region
      %1160 = vsyncadd [#allocation3], 0
      %s1162 = sshll.u32 [#allocation2], 4
      %s1163 = int_to_ptr.vmem [resolvable:$true] %s1162
      %s1164 = sshll.u32 %s8, 4
      %s1165 = int_to_ptr.hbm [resolvable:$true] %s1164
      %1167 = dma.vmem_to_hbm [thread:$0]  %s1163, 32, %s1165, [#allocation3]
    $region37: #{santa_fe_lstm_forward.1} parent=1 // pred_fallthru
      _
    // Predicated region
    $region38: #{santa_fe_lstm_forward.1} parent=1 // pred_check
      _
    $region39: #{santa_fe_lstm_forward.1} parent=1 // pred_check_branch
      %1169 = sbr.rel (0) target = $region41
    $region40: #{santa_fe_lstm_forward.1} parent=1 // pred_region
      %1171 = dma.done [#allocation3], 32
    $region41: #{santa_fe_lstm_forward.1} parent=1 // pred_fallthru
      _
    %1172 = vsyncpa [#allocation3], 1

</llo_original>
